<compile_context>
chip_gen: v5e
topology: v5e:2x2
jax: 0.10.0
libtpu: 0.0.40
codegen_flags: <defaults>
</compile_context>

<pallas_src>
import jax
import jax.numpy as jnp
from jax import lax
from jax.experimental import pallas as pl
from jax.experimental.pallas import tpu as pltpu


# ---------------------------------------------------------------------------
# Kernel
# ---------------------------------------------------------------------------
def _kd_mse_kernel(s_ref, t_ref, out_ref, acc_ref):
    i = pl.program_id(1)  # inner (reduction / streaming) axis

    @pl.when(i == 0)
    def _():
        acc_ref[...] = jnp.zeros_like(acc_ref)

    s = s_ref[...].astype(jnp.float32)
    t = t_ref[...].astype(jnp.float32)

    # Per-row second moments (cross-lane reductions on the XLU): (block_b, 1).
    # NOTE: for bf16/small-D shapes verify in a bundle dump that the XLU slot
    # does not become binding before HBM; for f32/large-D this is free filler.
    ss = jnp.sum(s * s, axis=1, keepdims=True)
    tt = jnp.sum(t * t, axis=1, keepdims=True)
    st = jnp.sum(s * t, axis=1, keepdims=True)

    # 1 / max(||x||, 1e-12) == rsqrt(max(||x||^2, 1e-24))  (sqrt monotonic).
    # A padded all-zero row gives ss = tt = st = 0 -> row_loss = 0 exactly.
    eps2 = jnp.float32(1e-24)
    inv_s = lax.rsqrt(jnp.maximum(ss, eps2))
    inv_t = lax.rsqrt(jnp.maximum(tt, eps2))

    # sum_j (s_n - t_n)^2 per row, without materializing s_n / t_n / diff.
    row_loss = (ss * inv_s * inv_s
                + tt * inv_t * inv_t
                - 2.0 * st * inv_s * inv_t)

    acc_ref[...] += row_loss

    @pl.when(i == pl.num_programs(1) - 1)
    def _():
        # Single sublane reduce + SMEM write per shard (not per step).
        out_ref[0, 0] = jnp.sum(acc_ref[...])


# ---------------------------------------------------------------------------
# Wrapper helpers
# ---------------------------------------------------------------------------
def _vmem_capacity_bytes():
    """Per-TensorCore VMEM capacity; conservative fallback if unknown."""
    try:
        info = pltpu.get_tpu_info()
        cap = getattr(info, "vmem_capacity_bytes", None)
        if cap:
            return int(cap)
    except Exception:
        pass
    try:
        kind = jax.devices()[0].device_kind.lower()
        if "v7" in kind:
            return 64 * 1024 * 1024
    except Exception:
        pass
    return 64 * 1024 * 1024  # conservative (v7x-sized) default


def _num_tensorcores():
    """2 on v7x-class chips (2 TCs/chip), else 1 (v5e/v6e)."""
    try:
        kind = jax.devices()[0].device_kind.lower()
        if "v7" in kind:
            return 2
    except Exception:
        pass
    return 1


def _sublane_align(itemsize):
    # Sub-32-bit dtypes pack along sublanes: 8 rows f32, 16 bf16, 32 int8/fp8.
    return {4: 8, 2: 16, 1: 32}.get(int(itemsize), 8)


def _choose_block_b(B, D, itemsize, align, target_tile_bytes):
    """Largest align-multiple row block whose (block_b, D) tile fits the
    per-input tile budget; shrunk when that would leave <4 pipeline steps
    while the batch is large enough to afford 4."""
    row_bytes = max(1, D * itemsize)
    rows_budget = max(align, (target_tile_bytes // row_bytes) // align * align)
    b_cover = -(-B // align) * align            # B rounded up to alignment
    block_b = min(rows_budget, b_cover)
    n_steps = -(-b_cover // block_b)
    if n_steps < 4 and (b_cover // align) >= 4:
        block_b = max(align, (b_cover // 4) // align * align)
    return block_b


# ---------------------------------------------------------------------------
# Public entry point
# ---------------------------------------------------------------------------
def kd_mse_loss(student_descriptors, teacher_descriptors,
                block_b=None, num_shards=None):
    """Pallas implementation of KDMSELoss.forward (returns scalar f32)."""
    assert student_descriptors.shape == teacher_descriptors.shape
    assert student_descriptors.ndim == 2
    B, D = student_descriptors.shape
    itemsize = jnp.dtype(student_descriptors.dtype).itemsize
    align = _sublane_align(itemsize)

    vmem_cap = _vmem_capacity_bytes()
    # Per-input tile target: 8-16 MiB (measured HBM-stream sweet spot), sized
    # so the double-buffered working set (4x tile) stays within ~half of VMEM:
    # ~32 MiB on v7x (64 MiB VMEM/TC), up to ~64 MiB on v5e/v6e (128 MiB VMEM).
    target_tile_bytes = min(16 * 1024 * 1024, vmem_cap // 8)

    if block_b is None:
        block_b = _choose_block_b(B, D, itemsize, align, target_tile_bytes)
    else:
        block_b = max(align, -(-int(block_b) // align) * align)

    n_blocks_est = -(-B // block_b)
    if num_shards is None:
        # Only split the leading "parallel" axis on multi-TensorCore chips and
        # only when each shard still gets a reasonably deep pipeline.
        num_shards = 2 if (_num_tensorcores() >= 2 and n_blocks_est >= 8) else 1
    num_shards = max(1, int(num_shards))

    # Zero-pad B up to a multiple of block_b * num_shards. Padded rows have
    # ||x||^2 = 0 -> clamped by eps -> per-row loss exactly 0, so the sum is
    # unchanged; the mean divisor below uses the ORIGINAL B.
    chunk = block_b * num_shards
    padded_B = -(-B // chunk) * chunk
    s_in, t_in = student_descriptors, teacher_descriptors
    if padded_B != B:
        pad = padded_B - B
        s_in = jnp.pad(s_in, ((0, pad), (0, 0)))
        t_in = jnp.pad(t_in, ((0, pad), (0, 0)))

    n_blocks = padded_B // block_b
    steps = n_blocks // num_shards

    # VMEM budget: double-buffered working set + accumulator + slack,
    # capped at physical capacity (never clamped below the working set).
    tile_bytes = block_b * D * itemsize
    working_set = 2 * 2 * tile_bytes           # 2 inputs x 2 buffers x tile
    acc_bytes = block_b * 4
    vmem_limit = int(min(max(working_set + acc_bytes + (4 << 20), 16 << 20),
                         vmem_cap))

    def in_map(p, i):
        return (p * steps + i, 0)

    partial = pl.pallas_call(
        _kd_mse_kernel,
        out_shape=jax.ShapeDtypeStruct((num_shards, 1), jnp.float32),
        grid_spec=pltpu.PrefetchScalarGridSpec(
            num_scalar_prefetch=0,
            grid=(num_shards, steps),
            in_specs=[
                pl.BlockSpec((block_b, D), in_map),
                pl.BlockSpec((block_b, D), in_map),
            ],
            out_specs=pl.BlockSpec((1, 1), lambda p, i: (p, 0),
                                   memory_space=pltpu.SMEM),
            scratch_shapes=[pltpu.VMEM((block_b, 1), jnp.float32)],
        ),
        # TODO(synk): on v7x verify in the Mosaic lowering that the leading
        # "parallel" axis is megacore-sharded; otherwise switch it to
        # pltpu.CORE_PARALLEL with one output slot per core.
        compiler_params=pltpu.CompilerParams(
            dimension_semantics=("parallel", "arbitrary"),
            vmem_limit_bytes=vmem_limit,
        ),
    )(s_in, t_in)

    # Tiny cross-shard sum + mean finished in plain JAX (divide by original B*D).
    return jnp.sum(partial) / jnp.float32(B * D)


# ---------------------------------------------------------------------------
# Pure-JAX reference
# ---------------------------------------------------------------------------
def _reference(student, teacher):
    eps = 1e-12
    s = student.astype(jnp.float32)
    t = teacher.astype(jnp.float32)
    s = s / jnp.maximum(jnp.linalg.norm(s, axis=1, keepdims=True), eps)
    t = t / jnp.maximum(jnp.linalg.norm(t, axis=1, keepdims=True), eps)
    return jnp.mean((s - t) ** 2)


if __name__ == "__main__":
    key = jax.random.PRNGKey(0)
    k1, k2, k3, k4, k5, k6 = jax.random.split(key, 6)

    # f32, 8-divisible batch (tiles into 4 blocks of 8 rows).
    B, D = 32, 256
    student = jax.random.normal(k1, (B, D), dtype=jnp.float32)
    teacher = jax.random.normal(k2, (B, D), dtype=jnp.float32)
    loss = jax.block_until_ready(kd_mse_loss(student, teacher))
    ref = _reference(student, teacher)
    assert jnp.allclose(loss, ref, rtol=1e-4, atol=1e-6), (loss, ref)

    # Non-8-divisible batch -> exercises the zero-padding path.
    B2, D2 = 30, 256
    s2 = jax.random.normal(k3, (B2, D2), dtype=jnp.float32)
    t2 = jax.random.normal(k4, (B2, D2), dtype=jnp.float32)
    loss2 = jax.block_until_ready(kd_mse_loss(s2, t2))
    ref2 = _reference(s2, t2)
    assert jnp.allclose(loss2, ref2, rtol=1e-4, atol=1e-6), (loss2, ref2)

    # bf16 descriptors -> dtype-aware sublane alignment (16) + padding.
    B3, D3 = 24, 256
    s3 = jax.random.normal(k5, (B3, D3), dtype=jnp.bfloat16)
    t3 = jax.random.normal(k6, (B3, D3), dtype=jnp.bfloat16)
    loss3 = jax.block_until_ready(kd_mse_loss(s3, t3))
    ref3 = _reference(s3, t3)
    assert jnp.allclose(loss3, ref3, rtol=5e-3, atol=1e-5), (loss3, ref3)

    print("KERNEL_OK")
</pallas_src>

<mosaic_0001>
module attributes {stable_mosaic.version = 11 : i64} {
  func.func @_kd_mse_kernel(%arg0: i32, %arg1: i32, %arg2: memref<8x256xf32, #tpu.memory_space<vmem>>, %arg3: memref<8x256xf32, #tpu.memory_space<vmem>>, %arg4: memref<1x1xf32, #tpu.memory_space<smem>>, %arg5: memref<8x1xf32, #tpu.memory_space<vmem>>) attributes {dimension_semantics = [#tpu.dimension_semantics<parallel>, #tpu.dimension_semantics<arbitrary>], iteration_bounds = array<i64: 1, 4>, scalar_prefetch = 0 : i64, scratch_operands = 1 : i64, tpu.core_type = #tpu.core_type<tc>, window_params = [{transform_indices = @transform_0, window_bounds = array<i64: 8, 256>}, {transform_indices = @transform_1, window_bounds = array<i64: 8, 256>}, {transform_indices = @transform_2, window_bounds = array<i64: 1, 1>}]} {
    %c0_i32 = arith.constant 0 : i32
    %0 = arith.cmpi eq, %arg1, %c0_i32 : i32
    %1 = arith.extui %0 : i1 to i32
    %c0_i32_0 = arith.constant 0 : i32
    %2 = arith.cmpi ne, %1, %c0_i32_0 : i32
    scf.if %2 {
      %cst_14 = arith.constant 0.000000e+00 : f32
      %36 = vector.broadcast %cst_14 : f32 to vector<8x1xf32>
      %c0_15 = arith.constant 0 : index
      %c0_16 = arith.constant 0 : index
      %37 = vector.load %arg5[%c0_15, %c0_16] : memref<8x1xf32, #tpu.memory_space<vmem>>, vector<8x1xf32>
      tpu.vector_store %arg5[%c0_15, %c0_16], %36 {strides = array<i32>} : memref<8x1xf32, #tpu.memory_space<vmem>>, vector<8x1xf32>,
    } else {
    }
    %c0 = arith.constant 0 : index
    %c0_1 = arith.constant 0 : index
    %3 = vector.load %arg2[%c0, %c0_1] : memref<8x256xf32, #tpu.memory_space<vmem>>, vector<8x256xf32>
    %c0_2 = arith.constant 0 : index
    %c0_3 = arith.constant 0 : index
    %4 = vector.load %arg3[%c0_2, %c0_3] : memref<8x256xf32, #tpu.memory_space<vmem>>, vector<8x256xf32>
    %5 = arith.mulf %3, %3 : vector<8x256xf32>
    %cst = arith.constant dense<0.000000e+00> : vector<8xf32>
    %6 = vector.multi_reduction <add>, %5, %cst [1] : vector<8x256xf32> to vector<8xf32>
    %7 = vector.shape_cast %6 : vector<8xf32> to vector<8x1xf32>
    %8 = arith.mulf %4, %4 : vector<8x256xf32>
    %cst_4 = arith.constant dense<0.000000e+00> : vector<8xf32>
    %9 = vector.multi_reduction <add>, %8, %cst_4 [1] : vector<8x256xf32> to vector<8xf32>
    %10 = vector.shape_cast %9 : vector<8xf32> to vector<8x1xf32>
    %11 = arith.mulf %3, %4 : vector<8x256xf32>
    %cst_5 = arith.constant dense<0.000000e+00> : vector<8xf32>
    %12 = vector.multi_reduction <add>, %11, %cst_5 [1] : vector<8x256xf32> to vector<8xf32>
    %13 = vector.shape_cast %12 : vector<8xf32> to vector<8x1xf32>
    %cst_6 = arith.constant 1.000000e-24 : f32
    %14 = vector.broadcast %cst_6 : f32 to vector<8x1xf32>
    %15 = arith.maximumf %7, %14 : vector<8x1xf32>
    %16 = math.rsqrt %15 : vector<8x1xf32>
    %cst_7 = arith.constant 1.000000e-24 : f32
    %17 = vector.broadcast %cst_7 : f32 to vector<8x1xf32>
    %18 = arith.maximumf %10, %17 : vector<8x1xf32>
    %19 = math.rsqrt %18 : vector<8x1xf32>
    %20 = arith.mulf %7, %16 : vector<8x1xf32>
    %21 = arith.mulf %20, %16 : vector<8x1xf32>
    %22 = arith.mulf %10, %19 : vector<8x1xf32>
    %23 = arith.mulf %22, %19 : vector<8x1xf32>
    %24 = arith.addf %21, %23 : vector<8x1xf32>
    %cst_8 = arith.constant 2.000000e+00 : f32
    %25 = vector.broadcast %cst_8 : f32 to vector<8x1xf32>
    %26 = arith.mulf %25, %13 : vector<8x1xf32>
    %27 = arith.mulf %26, %16 : vector<8x1xf32>
    %28 = arith.mulf %27, %19 : vector<8x1xf32>
    %29 = arith.subf %24, %28 : vector<8x1xf32>
    %c0_9 = arith.constant 0 : index
    %c0_10 = arith.constant 0 : index
    %30 = vector.load %arg5[%c0_9, %c0_10] : memref<8x1xf32, #tpu.memory_space<vmem>>, vector<8x1xf32>
    %31 = arith.addf %30, %29 : vector<8x1xf32>
    %c0_11 = arith.constant 0 : index
    %c0_12 = arith.constant 0 : index
    %32 = vector.load %arg5[%c0_11, %c0_12] : memref<8x1xf32, #tpu.memory_space<vmem>>, vector<8x1xf32>
    tpu.vector_store %arg5[%c0_11, %c0_12], %31 {strides = array<i32>} : memref<8x1xf32, #tpu.memory_space<vmem>>, vector<8x1xf32>,
    %c3_i32 = arith.constant 3 : i32
    %33 = arith.cmpi eq, %arg1, %c3_i32 : i32
    %34 = arith.extui %33 : i1 to i32
    %c0_i32_13 = arith.constant 0 : i32
    %35 = arith.cmpi ne, %34, %c0_i32_13 : i32
    scf.if %35 {
      %c0_14 = arith.constant 0 : index
      %c0_15 = arith.constant 0 : index
      %36 = vector.load %arg5[%c0_14, %c0_15] : memref<8x1xf32, #tpu.memory_space<vmem>>, vector<8x1xf32>
      %37 = vector.shape_cast %36 : vector<8x1xf32> to vector<1x8x1xf32>
      %cst_16 = arith.constant dense<0.000000e+00> : vector<1xf32>
      %38 = vector.multi_reduction <add>, %37, %cst_16 [1, 2] : vector<1x8x1xf32> to vector<1xf32>
      %39 = vector.shape_cast %38 : vector<1xf32> to vector<1x1x1xf32>
      %40 = vector.extract %39[0, 0, 0] : f32 from vector<1x1x1xf32>
      %c0_17 = arith.constant 0 : index
      %c0_18 = arith.constant 0 : index
      %41 = memref.load %arg4[%c0_17, %c0_18] : memref<1x1xf32, #tpu.memory_space<smem>>
      memref.store %40, %arg4[%c0_17, %c0_18] : memref<1x1xf32, #tpu.memory_space<smem>>
    } else {
    }
    return
  }
  func.func @transform_0(%arg0: i32, %arg1: i32) -> (i32, i32) {
    %c4_i32 = arith.constant 4 : i32
    %0 = arith.muli %arg0, %c4_i32 : i32
    %1 = arith.addi %0, %arg1 : i32
    %c0_i32 = arith.constant 0 : i32
    %c0_i32_0 = arith.constant 0 : i32
    return %1, %c0_i32 : i32, i32
  }
  func.func @transform_1(%arg0: i32, %arg1: i32) -> (i32, i32) {
    %c4_i32 = arith.constant 4 : i32
    %0 = arith.muli %arg0, %c4_i32 : i32
    %1 = arith.addi %0, %arg1 : i32
    %c0_i32 = arith.constant 0 : i32
    %c0_i32_0 = arith.constant 0 : i32
    return %1, %c0_i32 : i32, i32
  }
  func.func @transform_2(%arg0: i32, %arg1: i32) -> (i32, i32) {
    %c0_i32 = arith.constant 0 : i32
    %c0_i32_0 = arith.constant 0 : i32
    return %arg0, %c0_i32 : i32, i32
  }
}

</mosaic_0001>

<llo_original>
// kernel: tpu_custom_call.1
$region0: #{tpu_custom_call.1}
  #allocation0 [shape = 'u32[]', space=smem, size = 0x4, offset = 0x4, fixed_abs, tag = 'smem constant byte address 0x4 - core index']
  #allocation1 [shape = 'u32[72,128]{1,0:T(1,128)}', space=vmem, size = 0x9000, scoped, tag = 'internal scratch']
  #allocation2 [shape = 'f32[8,1]{1,0:T(8,128)}', space=vmem, size = 0x1000, scoped, tag = 'scratch operand']
  %s0 = inlined_call_operand.hbm [shape: f32[32,256], index: 0, kind: input, shape index: {}]
  %s1 = inlined_call_operand.hbm [shape: f32[32,256], index: 1, kind: input, shape index: {}]
  %s2 = inlined_call_operand.hbm [shape: f32[1,1], index: 2, kind: output, shape index: {}]
  %s3 = sld [smem:[#allocation0]]
  $region57: #{tpu_custom_call.1} parent=0
    _
  %s5 = ssub.s32 1, %s3
  %s6 = scalar_select 0, %s5, %s3
  $region1: #{tpu_custom_call.1} parent=0
    #allocation3 [shape = 'u8[16384]{0}', space=vmem, size = 0x4000, scoped, tag = 'input window, operand 0']
    #allocation4 [shape = 's32[2]{0}', space=sflag, size = 0x8, scoped, tag = 'scoped memory for tpu_custom_call.1']
    #allocation5 [shape = 's32[2]{0}', space=sflag, size = 0x8, scoped, tag = 'scoped memory for tpu_custom_call.1']
    #allocation6 [shape = 'u8[16384]{0}', space=vmem, size = 0x4000, scoped, tag = 'input window, operand 1']
    #allocation7 [shape = 's32[2]{0}', space=sflag, size = 0x8, scoped, tag = 'scoped memory for tpu_custom_call.1']
    #allocation8 [shape = 'u8[512]{0}', space=smem, size = 0x200, scoped, tag = 'output window, operand 0, single buffered']
    %7 = vsyncpa [#allocation4], 0
    %s8 = scalar_lea.sflag [#allocation4], 1
    %9 = vsyncpa %s8, 0
    %10 = vsyncpa [#allocation7], 0
    %s11 = scalar_lea.sflag [#allocation7], 1
    %12 = vsyncpa %s11, 0
    %13 = vsyncpa [#allocation5], 0
    loop: start=0, step=1, limit=6
    $region2: #{tpu_custom_call.1} parent=1 // loop_pre_header
      _
    $region3: #{tpu_custom_call.1} parent=1 // loop_header
      %s15 = sphi 0, %s19
      %p16 = scmp.ge.s32.totalorder %s15, 6
      %s22 = sphi 0, %s34
      %s23 = sphi 0, %s30
      %s24 = sphi 0, %s22
      %s25 = sphi 0, %s23
      %s26 = sphi 0, %s24
      %s27 = sphi 0, %s25
      %s41 = sphi 0, %s43
      %s44 = sphi 0, %s41
      %s45 = sphi 0, %s44
      %s61 = sphi 0, %s45
      %s71 = sphi 0, %s73
      %s74 = sphi 0, %s71
      %s75 = sphi 0, %s74
      %s91 = sphi 0, %s75
      %s97 = sphi 0, %s99
      %s100 = sphi 0, %s97
      %s101 = sphi 0, %s100
      %s117 = sphi 0, %s101
    $region4: #{tpu_custom_call.1} parent=1 // loop_header_branch
      %18 = sbr.rel (%p16) target = $region8
    $region5: #{tpu_custom_call.1} parent=1 // loop_body
      %s20 = ssub.s32 %s15, 1
      %s21 = ssub.s32 %s15, 2
      %s28 = sadd.s32 1, %s23
      %p29 = scmp.ge.s32.totalorder %s28, 4
      %s30 = scalar_select %p29, 0, %s28
      %s31 = sadd.s32 1, %s22
      %s32 = scalar_select %p29, %s31, %s22
      %p33 = scmp.ge.s32.totalorder %s32, 1
      %s34 = scalar_select %p33, 0, %s32
      %s35 = smul.u32 %s22, 4
      %s36 = sadd.s32 %s35, %s23
      %s37 = smul.u32 %s34, 4
      %s38 = sadd.s32 %s37, %s30
      %s39 = ssub.s32 %s36, %s38
      %p40 = scmp.eq.s32.totalorder %s39, 0
      %s42 = sadd.s32 %s41, 1
      %s43 = scalar_select %p40, %s41, %s42
      %p46 = pneg %p40
      %p47 = scmp.eq.s32.totalorder %s15, 3
      %p48 = por %p46, %p47
      %p49 = scmp.ne.s32.totalorder %s41, %s44
      %p50 = scmp.eq.s32.totalorder %s15, 0
      %p51 = por %p49, %p50
      %p52 = scmp.ne.s32.totalorder %s41, %s44
      %p53 = scmp.eq.s32.totalorder %s20, 3
      %p54 = por %p52, %p53
      %p55 = scmp.ne.s32.totalorder %s44, %s45
      %p56 = scmp.eq.s32.totalorder %s20, 0
      %p57 = por %p55, %p56
      %p58 = scmp.ne.s32.totalorder %s44, %s45
      %p59 = scmp.eq.s32.totalorder %s21, 3
      %p60 = por %p58, %p59
      %p62 = scmp.ne.s32.totalorder %s45, %s61
      %p63 = scmp.eq.s32.totalorder %s21, 0
      %p64 = por %p62, %p63
      %s65 = smul.u32 %s22, 4
      %s66 = sadd.s32 %s65, %s23
      %s67 = smul.u32 %s34, 4
      %s68 = sadd.s32 %s67, %s30
      %s69 = ssub.s32 %s66, %s68
      %p70 = scmp.eq.s32.totalorder %s69, 0
      %s72 = sadd.s32 %s71, 1
      %s73 = scalar_select %p70, %s71, %s72
      %p76 = pneg %p70
      %p77 = scmp.eq.s32.totalorder %s15, 3
      %p78 = por %p76, %p77
      %p79 = scmp.ne.s32.totalorder %s71, %s74
      %p80 = scmp.eq.s32.totalorder %s15, 0
      %p81 = por %p79, %p80
      %p82 = scmp.ne.s32.totalorder %s71, %s74
      %p83 = scmp.eq.s32.totalorder %s20, 3
      %p84 = por %p82, %p83
      %p85 = scmp.ne.s32.totalorder %s74, %s75
      %p86 = scmp.eq.s32.totalorder %s20, 0
      %p87 = por %p85, %p86
      %p88 = scmp.ne.s32.totalorder %s74, %s75
      %p89 = scmp.eq.s32.totalorder %s21, 3
      %p90 = por %p88, %p89
      %p92 = scmp.ne.s32.totalorder %s75, %s91
      %p93 = scmp.eq.s32.totalorder %s21, 0
      %p94 = por %p92, %p93
      %s95 = ssub.s32 %s22, %s34
      %p96 = scmp.eq.s32.totalorder %s95, 0
      %s98 = sadd.s32 %s97, 1
      %s99 = scalar_select %p96, %s97, %s98
      %p102 = pneg %p96
      %p103 = scmp.eq.s32.totalorder %s15, 3
      %p104 = por %p102, %p103
      %p105 = scmp.ne.s32.totalorder %s97, %s100
      %p106 = scmp.eq.s32.totalorder %s15, 0
      %p107 = por %p105, %p106
      %p108 = scmp.ne.s32.totalorder %s97, %s100
      %p109 = scmp.eq.s32.totalorder %s20, 3
      %p110 = por %p108, %p109
      %p111 = scmp.ne.s32.totalorder %s100, %s101
      %p112 = scmp.eq.s32.totalorder %s20, 0
      %p113 = por %p111, %p112
      %p114 = scmp.ne.s32.totalorder %s100, %s101
      %p115 = scmp.eq.s32.totalorder %s21, 3
      %p116 = por %p114, %p115
      %p118 = scmp.ne.s32.totalorder %s101, %s117
      %p119 = scmp.eq.s32.totalorder %s21, 0
      %p120 = por %p118, %p119
      %p121 = scmp.le.s32.totalorder 1, %s15
      %p122 = scmp.lt.s32.totalorder %s15, 5
      %p123 = pnand %p121, %p122
      %p124 = pneg %p123
      // Predicated region
      $region9: #{tpu_custom_call.1} parent=5 // pred_check
        _
      $region10: #{tpu_custom_call.1} parent=5 // pred_check_branch
        %126 = sbr.rel (%p123) target = $region12
      $region11: #{tpu_custom_call.1} parent=5 // pred_region
        %s127 = ssub.s32 %s15, 1
      $region12: #{tpu_custom_call.1} parent=5 // pred_fallthru
        _
      %p128 = scmp.lt.s32.totalorder %s15, 4
      // Predicated region
      $region13: #{tpu_custom_call.1} parent=5 // pred_check
        %p129 = pneg %p128
      $region14: #{tpu_custom_call.1} parent=5 // pred_check_branch
        %131 = sbr.rel (%p129) target = $region16
      $region15: #{tpu_custom_call.1} parent=5 // pred_region
        // Predicated region
        $region17: #{tpu_custom_call.1} parent=15 // pred_check
          %p132 = pneg %p51
        $region18: #{tpu_custom_call.1} parent=15 // pred_check_branch
          %134 = sbr.rel (%p132) target = $region20
        $region19: #{tpu_custom_call.1} parent=15 // pred_region
          %s135 = sand.u32 %s41, 1
          %s136 = scalar_lea.sflag [#allocation4], %s135
          %s137 = sand.u32 %s41, 1
          %s138 = smul.addr %s137, 16
          %s139 = scalar_lea.vmem [#allocation3], %s138
          %s140 = smul.u32 %s22, 4
          %s141 = sadd.s32 %s140, %s23
          %143 = vsyncadd %s136, 0
          %s144 = smul.addr %s141, 2
          %s145 = smul.addr %s144, 8
          %s146 = scalar_lea.hbm %s0, %s145
          %s148 = sshll.u32 %s146, 4
          %s149 = int_to_ptr.hbm [resolvable:$true] %s148
          %s150 = sshll.u32 %s139, 4
          %s151 = int_to_ptr.vmem [resolvable:$true] %s150
          %153 = dma.hbm_to_vmem [thread:$0]  %s149, 256, %s151, %s136
        $region20: #{tpu_custom_call.1} parent=15 // pred_fallthru
          _
        // Predicated region
        $region21: #{tpu_custom_call.1} parent=15 // pred_check
          %p154 = pneg %p81
        $region22: #{tpu_custom_call.1} parent=15 // pred_check_branch
          %156 = sbr.rel (%p154) target = $region24
        $region23: #{tpu_custom_call.1} parent=15 // pred_region
          %s157 = sand.u32 %s71, 1
          %s158 = scalar_lea.sflag [#allocation7], %s157
          %s159 = sand.u32 %s71, 1
          %s160 = smul.addr %s159, 16
          %s161 = scalar_lea.vmem [#allocation6], %s160
          %s162 = smul.u32 %s22, 4
          %s163 = sadd.s32 %s162, %s23
          %165 = vsyncadd %s158, 0
          %s166 = smul.addr %s163, 2
          %s167 = smul.addr %s166, 8
          %s168 = scalar_lea.hbm %s1, %s167
          %s170 = sshll.u32 %s168, 4
          %s171 = int_to_ptr.hbm [resolvable:$true] %s170
          %s172 = sshll.u32 %s161, 4
          %s173 = int_to_ptr.vmem [resolvable:$true] %s172
          %175 = dma.hbm_to_vmem [thread:$0]  %s171, 256, %s173, %s158
        $region24: #{tpu_custom_call.1} parent=15 // pred_fallthru
          _
      $region16: #{tpu_custom_call.1} parent=5 // pred_fallthru
        _
      %p176 = scmp.le.s32.totalorder 1, %s15
      %p177 = scmp.lt.s32.totalorder %s15, 5
      %p178 = pnand %p176, %p177
      %p179 = pneg %p178
      // Predicated region
      $region25: #{tpu_custom_call.1} parent=5 // pred_check
        _
      $region26: #{tpu_custom_call.1} parent=5 // pred_check_branch
        %181 = sbr.rel (%p178) target = $region28
      $region27: #{tpu_custom_call.1} parent=5 // pred_region
        %s182 = ssub.s32 %s15, 1
        %s183 = sand.u32 %s44, 1
        %s184 = scalar_lea.sflag [#allocation4], %s183
        %s185 = sand.u32 %s44, 1
        %s186 = smul.addr %s185, 16
        %s187 = scalar_lea.vmem [#allocation3], %s186
        // Predicated region
        $region29: #{tpu_custom_call.1} parent=27 // pred_check
          %p188 = pneg %p57
        $region30: #{tpu_custom_call.1} parent=27 // pred_check_branch
          %190 = sbr.rel (%p188) target = $region32
        $region31: #{tpu_custom_call.1} parent=27 // pred_region
          %192 = dma.done %s184, 256
        $region32: #{tpu_custom_call.1} parent=27 // pred_fallthru
          _
        %s193 = sand.u32 %s74, 1
        %s194 = scalar_lea.sflag [#allocation7], %s193
        %s195 = sand.u32 %s74, 1
        %s196 = smul.addr %s195, 16
        %s197 = scalar_lea.vmem [#allocation6], %s196
        // Predicated region
        $region33: #{tpu_custom_call.1} parent=27 // pred_check
          %p198 = pneg %p87
        $region34: #{tpu_custom_call.1} parent=27 // pred_check_branch
          %200 = sbr.rel (%p198) target = $region36
        $region35: #{tpu_custom_call.1} parent=27 // pred_region
          %202 = dma.done %s194, 256
        $region36: #{tpu_custom_call.1} parent=27 // pred_fallthru
          _
        %s203 = sand.u32 %s44, 1
        %s204 = scalar_lea.sflag [#allocation4], %s203
        %s205 = sand.u32 %s44, 1
        %s206 = smul.addr %s205, 16
        %s207 = scalar_lea.vmem [#allocation3], %s206
        %p208 = pneg %p57
        %p209 = pneg %p54
        %s210 = sand.u32 %s74, 1
        %s211 = scalar_lea.sflag [#allocation7], %s210
        %s212 = sand.u32 %s74, 1
        %s213 = smul.addr %s212, 16
        %s214 = scalar_lea.vmem [#allocation6], %s213
        %p215 = pneg %p87
        %p216 = pneg %p84
        %p217 = pneg %p113
        %p218 = pneg %p110
        %s219 = smul.u32 %s24, 4
        %s220 = sadd.s32 %s219, %s25
        %s221 = smul.u32 %s24, 4
        %s222 = sadd.s32 %s221, %s25
        %p223 = scmp.eq.s32.totalorder %s25, 0
        // Predicated region
        $region37: #{tpu_custom_call.1} parent=27 // pred_check
          %p224 = pneg %p223
        $region38: #{tpu_custom_call.1} parent=27 // pred_check_branch
          %226 = sbr.rel (%p224) target = $region40
        $region39: #{tpu_custom_call.1} parent=27 // pred_region
          %vm227 = vcmask 7168
          %228 = vst.msk [vmem:[#allocation2] sm:$0xff] %vm227, 0.0
        $region40: #{tpu_custom_call.1} parent=27 // pred_fallthru
          _
        %v229 = vld [vmem:[%s187] sm:$0xff]
        %v230 = vld [vmem:[%s187 + $0x8] sm:$0xff]
        %v231 = vld [vmem:[%s197] sm:$0xff]
        %v232 = vld [vmem:[%s197 + $0x8] sm:$0xff]
        %v233 = vmul.f32 %v229, %v229
        %v234 = vmul.f32 %v230, %v230
        %v235 = vadd.f32 %v233, %v234
        %236 = vadd.xlane.f32.xlu0 %v235
        %v237 = vpop.xlane.xlu0 %236
        %v238 = vmul.f32 %v231, %v231
        %v239 = vmul.f32 %v232, %v232
        %v240 = vadd.f32 %v238, %v239
        %241 = vadd.xlane.f32.xlu0 %v240
        %v242 = vpop.xlane.xlu0 %241
        %v243 = vmul.f32 %v229, %v231
        %v244 = vmul.f32 %v230, %v232
        %v245 = vadd.f32 %v243, %v244
        %246 = vadd.xlane.f32.xlu0 %v245
        %v247 = vpop.xlane.xlu0 %246
        %v248 = vmax.f32 %v237, 1e-24
        %v249 = vrsqrt.pop %v248
        %v250 = vmul.f32 %v249, %v248
        %v251 = vmul.f32 %v250, %v249
        %v252 = vmul.f32 0.5, %v251
        %v253 = vsub.f32 1.5, %v252
        %v254 = vmul.f32 %v249, %v253
        %vm255 = vweird.f32 %v248
        %vm256 = vweird.f32 %v249
        %vm257 = vmor %vm255, %vm256
        %v258 = vsel %vm257, %v249, %v254
        %v259 = vmax.f32 %v242, 1e-24
        %v260 = vrsqrt.pop %v259
        %v261 = vmul.f32 %v260, %v259
        %v262 = vmul.f32 %v261, %v260
        %v263 = vmul.f32 0.5, %v262
        %v264 = vsub.f32 1.5, %v263
        %v265 = vmul.f32 %v260, %v264
        %vm266 = vweird.f32 %v259
        %vm267 = vweird.f32 %v260
        %vm268 = vmor %vm266, %vm267
        %v269 = vsel %vm268, %v260, %v265
        %v270 = vmul.f32 %v237, %v258
        %v271 = vmul.f32 %v270, %v258
        %v272 = vmul.f32 %v242, %v269
        %v273 = vmul.f32 %v272, %v269
        %v274 = vadd.f32 %v271, %v273
        %v275 = vmul.f32 %v247, 2.0
        %v276 = vmul.f32 %v275, %v258
        %v277 = vmul.f32 %v276, %v269
        %v278 = vsub.f32 %v274, %v277
        %v279 = vld [vmem:[#allocation2] sm:$0xff]
        %v280 = vadd.f32 %v279, %v278
        %vm281 = vcmask 7168
        %282 = vst.msk [vmem:[#allocation2] sm:$0xff] %vm281, %v280
        %p283 = scmp.eq.s32.totalorder %s25, 3
        // Predicated region
        $region41: #{tpu_custom_call.1} parent=27 // pred_check
          %p284 = pneg %p283
        $region42: #{tpu_custom_call.1} parent=27 // pred_check_branch
          %286 = sbr.rel (%p284) target = $region44
        $region43: #{tpu_custom_call.1} parent=27 // pred_region
          %v287 = vld [vmem:[#allocation2] sm:$0xff]
          %v288 = vsel %vm281, %v287, 0.0
          %289 = vadd.xlane.f32.xlu0 %v288
          %v290 = vpop.xlane.xlu0 %289
          %v291 = vrot.slane %v290, 4
          %v292 = vadd.f32 %v290, %v291
          %v293 = vrot.slane %v292, 2
          %v294 = vadd.f32 %v292, %v293
          %v295 = vrot.slane %v294, 1
          %v296 = vadd.f32 %v294, %v295
          %s297 = vtos %v296
          %s298 = scalar_lea.smem [#allocation8], 0
          %299 = sst [smem:[%s298]] %s297
        $region44: #{tpu_custom_call.1} parent=27 // pred_fallthru
          _
        // Predicated region
        $region45: #{tpu_custom_call.1} parent=27 // pred_check
          %p300 = pneg %p110
        $region46: #{tpu_custom_call.1} parent=27 // pred_check_branch
          %302 = sbr.rel (%p300) target = $region48
        $region47: #{tpu_custom_call.1} parent=27 // pred_region
          %304 = vsyncadd [#allocation5], 0
          %s305 = scalar_lea.hbm %s2, %s24
          %s307 = sshll.u32 %s305, 4
          %s308 = int_to_ptr.hbm [resolvable:$true] %s307
          %310 = dma.smem_to_hbm [#allocation8], 16, %s308, [#allocation5]
        $region48: #{tpu_custom_call.1} parent=27 // pred_fallthru
          _
        // Predicated region
        $region49: #{tpu_custom_call.1} parent=27 // pred_check
          %p311 = pneg %p110
        $region50: #{tpu_custom_call.1} parent=27 // pred_check_branch
          %313 = sbr.rel (%p311) target = $region52
        $region51: #{tpu_custom_call.1} parent=27 // pred_region
          %315 = dma.done [#allocation5], 16
        $region52: #{tpu_custom_call.1} parent=27 // pred_fallthru
          _
        %316 = sfence
      $region28: #{tpu_custom_call.1} parent=5 // pred_fallthru
        _
      %p317 = scmp.le.s32.totalorder 2, %s15
      // Predicated region
      $region53: #{tpu_custom_call.1} parent=5 // pred_check
        %p318 = pneg %p317
      $region54: #{tpu_custom_call.1} parent=5 // pred_check_branch
        %320 = sbr.rel (%p318) target = $region56
      $region55: #{tpu_custom_call.1} parent=5 // pred_region
        %s321 = ssub.s32 %s15, 2
      $region56: #{tpu_custom_call.1} parent=5 // pred_fallthru
        _
    $region6: #{tpu_custom_call.1} parent=1 // loop_footer
      %s19 = sadd.s32 1, %s15
    $region7: #{tpu_custom_call.1} parent=1 // loop_footer_branch
      %14 = sbr.rel target = $region3
    $region8: #{tpu_custom_call.1} parent=1 // loop_exit
      _
    %322 = vsyncpa [#allocation4], 1
    %s323 = scalar_lea.sflag [#allocation4], 1
    %324 = vsyncpa %s323, 1
    %325 = vsyncpa [#allocation7], 1
    %s326 = scalar_lea.sflag [#allocation7], 1
    %327 = vsyncpa %s326, 1
    %328 = vsyncpa [#allocation5], 1
    %s329 = scalar_lea.sflag [#allocation5], 1
    %330 = vsyncpa %s329, 1

</llo_original>
